<compile_context>
chip_gen: v6e
topology: v6e:2x2x1
jax: 0.10.0
libtpu: 0.0.40
codegen_flags: <defaults>
</compile_context>

<pallas_src>
import jax
import jax.numpy as jnp
from jax.experimental import pallas as pl
from jax.experimental.pallas import tpu as pltpu

# Below this many bytes the pallas_call launch overhead dominates; use a
# plain XLA copy instead of the DMA kernel.
_SMALL_COPY_BYTES = 256 * 1024


def _dma_copy_kernel(x_hbm, o_hbm, sem):
    # Direct HBM->HBM DMA of the whole array (original shape, byte-for-byte).
    # No VMEM bounce, no vld/vst work, no tiling.
    cp = pltpu.make_async_copy(x_hbm, o_hbm, sem)
    cp.start()
    cp.wait()


def _pallas_hbm_copy(x):
    """Materialized identity copy via a single HBM->HBM DMA Pallas kernel."""
    return pl.pallas_call(
        _dma_copy_kernel,
        out_shape=jax.ShapeDtypeStruct(x.shape, x.dtype),
        in_specs=[pl.BlockSpec(memory_space=pl.ANY)],
        out_specs=pl.BlockSpec(memory_space=pl.ANY),
        scratch_shapes=[pltpu.SemaphoreType.DMA(())],
    )(x)


def identity_copy(x, *, min_kernel_bytes=_SMALL_COPY_BYTES):
    """Materialized identity copy of an arbitrary-rank array.

    Values, shape and dtype are preserved exactly. Large arrays go through a
    single HBM->HBM DMA Pallas kernel; tiny arrays take a plain XLA copy to
    avoid pure launch overhead.
    """
    x = jnp.asarray(x)
    if x.size == 0:
        return x
    nbytes = x.size * x.dtype.itemsize
    if nbytes < min_kernel_bytes:
        # Tiny tensor: custom-call launch overhead >> copy time.
        return jnp.copy(x)
    return _pallas_hbm_copy(x)


class LayerOffDevice:
    """JAX/Pallas port of the PyTorch LayerOffDevice module.

    __init__(device, layer): `device` and `layer` are kept only for interface
    parity; the wrapped layer's parameters (if any) play no role in forward.

    Default forward is a zero-cost passthrough (matches PyTorch semantics,
    which returns the inputs unchanged). Pass materialize=True to force a
    materialized copy (HBM->HBM DMA kernel for large arrays).
    """

    def __init__(self, device=None, layer=None, materialize=False):
        self.D = device
        self.layer = [layer]
        self._materialize = materialize

    def __call__(self, *args):
        # TODO(synk): the PyTorch version moves self.layer[0] to CPU here
        # (host-side placement side effect, not representable as TPU compute).
        if self._materialize:
            outs = tuple(identity_copy(a) for a in args)
        else:
            outs = args  # pure passthrough: no kernel, no HBM traffic
        if len(outs) == 1:
            return outs[0]
        return outs


if __name__ == "__main__":
    key = jax.random.PRNGKey(0)
    k1, k2 = jax.random.split(key)

    # Small, conv-style NCHW input consistent with a generic wrapped layer.
    x = jax.random.normal(k1, (2, 4, 16, 16), dtype=jnp.float32)
    # A second arg to exercise the multi-arg path.
    y = jax.random.normal(k2, (2, 8), dtype=jnp.float32)

    # Deterministic dummy "wrapped layer" parameters (unused by forward),
    # initialized in-script for interface parity with the nn.Module.
    dummy_layer_params = {
        "w": jax.random.normal(jax.random.PRNGKey(1), (4, 4, 3, 3),
                               dtype=jnp.float32)
    }

    # --- Fast path (default, matches PyTorch semantics: pure passthrough) ---
    mod = LayerOffDevice(device="tpu", layer=dummy_layer_params)

    out1 = mod(x)                              # single-arg path
    out1 = jax.block_until_ready(out1)
    assert out1.shape == x.shape and out1.dtype == x.dtype
    assert bool(jnp.array_equal(out1, x))

    out2 = mod(x, y)                           # multi-arg path
    out2 = jax.block_until_ready(out2)
    assert isinstance(out2, tuple) and len(out2) == 2
    assert bool(jnp.array_equal(out2[0], x))
    assert bool(jnp.array_equal(out2[1], y))

    # --- Materialized path via the module (tiny inputs -> XLA-copy fast path) ---
    mod_copy = LayerOffDevice(device="tpu", layer=dummy_layer_params,
                              materialize=True)
    out3 = mod_copy(x, y)
    out3 = jax.block_until_ready(out3)
    assert isinstance(out3, tuple) and len(out3) == 2
    assert out3[0].shape == x.shape and out3[0].dtype == x.dtype
    assert out3[1].shape == y.shape and out3[1].dtype == y.dtype
    assert bool(jnp.array_equal(out3[0], x))
    assert bool(jnp.array_equal(out3[1], y))

    # --- Exercise the HBM->HBM DMA Pallas kernel directly (both shapes) ---
    out4 = jax.block_until_ready(identity_copy(x, min_kernel_bytes=0))
    assert out4.shape == x.shape and out4.dtype == x.dtype
    assert bool(jnp.array_equal(out4, x))

    out5 = jax.block_until_ready(identity_copy(y, min_kernel_bytes=0))
    assert out5.shape == y.shape and out5.dtype == y.dtype
    assert bool(jnp.array_equal(out5, y))

    print("KERNEL_OK")
</pallas_src>

<mosaic_0001>
module attributes {stable_mosaic.version = 11 : i64} {
  func.func @_dma_copy_kernel(%arg0: memref<2x4x16x16xf32, #tpu.memory_space<any>>, %arg1: memref<2x4x16x16xf32, #tpu.memory_space<any>>, %arg2: memref<!tpu.dma_semaphore, #tpu.memory_space<semaphore_mem>>) attributes {dimension_semantics = [], scalar_prefetch = 0 : i64, scratch_operands = 1 : i64, tpu.core_type = #tpu.core_type<tc>} {
    tpu.enqueue_dma source(%arg0 : memref<2x4x16x16xf32, #tpu.memory_space<any>>) target(%arg1 : memref<2x4x16x16xf32, #tpu.memory_space<any>>) target_semaphore(%arg2 : memref<!tpu.dma_semaphore, #tpu.memory_space<semaphore_mem>>)
    tpu.wait_dma2 semaphore(%arg2 : memref<!tpu.dma_semaphore, #tpu.memory_space<semaphore_mem>>) src(%arg0 : memref<2x4x16x16xf32, #tpu.memory_space<any>>) dst(%arg1 : memref<2x4x16x16xf32, #tpu.memory_space<any>>)
    return
  }
}

</mosaic_0001>

<llo_original>
// kernel: tpu_custom_call.1
$region0: #{tpu_custom_call.1}
  #allocation0 [shape = 'u32[]', space=smem, size = 0x4, offset = 0x4, fixed_abs, tag = 'smem constant byte address 0x4 - core index']
  #allocation1 [shape = 'u32[144,128]{1,0:T(1,128)}', space=vmem, size = 0x12000, scoped, tag = 'internal scratch']
  #allocation2 [shape = 's32[1]{0}', space=sflag, size = 0x4, scoped, tag = 'scratch operand']
  #allocation3 [shape = 's32[]', space=sflag, size = 0x4, offset = 0, fixed_abs, tag = 'sflag constant byte address 0x0 - dummy sync flag']
  #allocation4 [shape = 'u32[0]{0}', space=smem, size = 0, offset = 0, fixed_abs, tag = 'smem constant byte address 0x0 - null']
  %s0 = inlined_call_operand.hbm [shape: f32[2,4,16,16], index: 0, kind: input, shape index: {}]
  %s1 = inlined_call_operand.hbm [shape: f32[2,4,16,16], index: 1, kind: output, shape index: {}]
  %s2 = sld [smem:[#allocation0]]
  $region2: #{tpu_custom_call.1} parent=0
    _
  %s4 = ssub.s32 1, %s2
  %s5 = scalar_select 0, %s4, %s2
  %s7 = sshll.u32 1, 14
  %s8 = sxor.u32 4294967295, %s7
  %12 = dma.general %s0, 2048, %s1, [#allocation2], 131072, [#allocation4], 0, 0
  %s13 = smul.u32 2, 4
  %s14 = smul.u32 %s13, 16
  %s15 = smul.u32 %s14, 1
  %s16 = sshll.u32 %s15, 4
  %17 = dma.done [#allocation2], %s16
  %18 = vsyncmov [#allocation2]
  %s19 = vpop.sfrf %18
  %p20 = scmp.eq.s32.totalorder %s19, 0
  %p21 = pneg %p20
  %23 = shalt.err (%p21)

</llo_original>
